<compile_context>
chip_gen: v6e
topology: v6e:2x2x1
jax: 0.10.0
libtpu: 0.0.40
codegen_flags: <defaults>
</compile_context>

<pallas_src>
import functools
import zlib

import numpy as np
import jax
import jax.numpy as jnp
from jax.experimental import pallas as pl
from jax.experimental.pallas import tpu as pltpu


def _round_up(x, m):
    return ((x + m - 1) // m) * m


_VMEM_LIMIT = 48 * 1024 * 1024        # safe on v7x (64 MiB physical) and below
_MM_VMEM_BUDGET = 20 * 1024 * 1024    # per-step double-buffered working-set target


# ----------------------------------------------------------------------------
# Pallas kernels: matmul (+bias, +ReLU) on the MXU
# ----------------------------------------------------------------------------

def _mm_single_kernel(a_ref, b_ref, bias_ref, o_ref, *, relu):
    # Full-K block: one MXU pass, fused f32 bias + ReLU epilogue, bf16 store.
    r = jnp.dot(a_ref[...], b_ref[...], preferred_element_type=jnp.float32)
    r = r + bias_ref[...]
    if relu:
        r = jnp.maximum(r, 0.0)
    o_ref[...] = r.astype(o_ref.dtype)


def _mm_kgrid_kernel(a_ref, b_ref, bias_ref, o_ref, acc_ref, *, relu):
    # Fallback for K > 4096 (unused by this network): f32 scratch accumulator.
    k = pl.program_id(2)

    @pl.when(k == 0)
    def _():
        acc_ref[...] = jnp.zeros_like(acc_ref)

    acc_ref[...] += jnp.dot(a_ref[...], b_ref[...],
                            preferred_element_type=jnp.float32)

    @pl.when(k == pl.num_programs(2) - 1)
    def _():
        r = acc_ref[...] + bias_ref[...]
        if relu:
            r = jnp.maximum(r, 0.0)
        o_ref[...] = r.astype(o_ref.dtype)


def _pick_tiles(M, K, N):
    tn = min(512, _round_up(N, 128))
    # Lane-align K when the padding overhead is negligible; otherwise pad to 16.
    Kp = _round_up(K, 128) if K >= 384 else _round_up(K, 16)
    m_cap = _round_up(M, 128)
    tm = 128
    for cand in (2048, 1024, 512, 256, 128):
        if cand > m_cap:
            continue
        need = (2 * 2 * (cand * Kp + Kp * tn + cand * tn)   # bf16, double-buffered
                + cand * tn * 4)                             # f32 epilogue temp
        if need <= _MM_VMEM_BUDGET:
            tm = cand
            break
    Mp = _round_up(M, tm)
    Np = _round_up(N, tn)
    # v7x shards parallel grid axes across 2 TensorCores: avoid a 1x1 grid.
    if Mp // tm == 1 and Np // tn == 1 and Np >= 256:
        tn = Np // 2 if (Np // 2) % 128 == 0 else 128
        Np = _round_up(N, tn)
    return tm, tn, Kp, Mp, Np


@functools.partial(jax.jit, static_argnames=("relu", "out_dtype"))
def matmul_bias_act(a, b, bias, *, relu=False, out_dtype=jnp.bfloat16):
    """(M,K) @ (K,N) + bias[N] (+ optional ReLU) on the MXU.

    Operands are bf16 (f32 accumulation via preferred_element_type); the
    bias/ReLU epilogue runs in f32 and the result is stored as `out_dtype`.
    """
    M, K = a.shape
    K2, N = b.shape
    assert K == K2

    tm, tn, Kp_single, Mp, Np = _pick_tiles(M, K, N)

    a16 = a.astype(jnp.bfloat16)
    b16 = b.astype(jnp.bfloat16)
    bias_p = jnp.pad(bias.astype(jnp.float32), (0, Np - N)).reshape(1, Np)

    if K <= 4096:
        # Single full-K block: no k grid axis, no accumulator read-modify-write.
        Kp = Kp_single
        a_p = jnp.pad(a16, ((0, Mp - M), (0, Kp - K)))
        b_p = jnp.pad(b16, ((0, Kp - K), (0, Np - N)))
        out = pl.pallas_call(
            functools.partial(_mm_single_kernel, relu=relu),
            out_shape=jax.ShapeDtypeStruct((Mp, Np), out_dtype),
            grid_spec=pltpu.PrefetchScalarGridSpec(
                num_scalar_prefetch=0,
                grid=(Mp // tm, Np // tn),
                in_specs=[
                    pl.BlockSpec((tm, Kp), lambda i, j: (i, 0)),
                    pl.BlockSpec((Kp, tn), lambda i, j: (0, j)),
                    pl.BlockSpec((1, tn), lambda i, j: (0, j)),
                ],
                out_specs=pl.BlockSpec((tm, tn), lambda i, j: (i, j)),
            ),
            compiler_params=pltpu.CompilerParams(
                dimension_semantics=("parallel", "parallel"),
                vmem_limit_bytes=_VMEM_LIMIT),
        )(a_p, b_p, bias_p)
    else:
        tm = min(tm, 512)
        Mp = _round_up(M, tm)
        tk = 1024
        Kp = _round_up(K, tk)
        a_p = jnp.pad(a16, ((0, Mp - M), (0, Kp - K)))
        b_p = jnp.pad(b16, ((0, Kp - K), (0, Np - N)))
        out = pl.pallas_call(
            functools.partial(_mm_kgrid_kernel, relu=relu),
            out_shape=jax.ShapeDtypeStruct((Mp, Np), out_dtype),
            grid_spec=pltpu.PrefetchScalarGridSpec(
                num_scalar_prefetch=0,
                grid=(Mp // tm, Np // tn, Kp // tk),
                in_specs=[
                    pl.BlockSpec((tm, tk), lambda i, j, k: (i, k)),
                    pl.BlockSpec((tk, tn), lambda i, j, k: (k, j)),
                    pl.BlockSpec((1, tn), lambda i, j, k: (0, j)),
                ],
                out_specs=pl.BlockSpec((tm, tn), lambda i, j, k: (i, j)),
                scratch_shapes=[pltpu.VMEM((tm, tn), jnp.float32)],
            ),
            compiler_params=pltpu.CompilerParams(
                dimension_semantics=("parallel", "parallel", "arbitrary"),
                vmem_limit_bytes=_VMEM_LIMIT),
        )(a_p, b_p, bias_p)
    return out[:M, :N]


# ----------------------------------------------------------------------------
# Pallas kernels: pooling
# ----------------------------------------------------------------------------

def _pool_window_kernel(x_ref, o_ref, *, ksize, mode):
    # Stride-1 window pool, fully in VMEM: x_ref (1, Hp, Wp, tc) zero-padded
    # input slab; o_ref (1, Ho, Wo, tc).  VPU max / sum of ksize^2 shifted windows.
    Ho, Wo = o_ref.shape[1], o_ref.shape[2]
    acc = None
    for i in range(ksize):
        for j in range(ksize):
            v = x_ref[:, i:i + Ho, j:j + Wo, :].astype(jnp.float32)
            if acc is None:
                acc = v
            elif mode == "max":
                acc = jnp.maximum(acc, v)
            else:
                acc = acc + v
    if mode == "avg":
        acc = acc * (1.0 / float(ksize * ksize))
    o_ref[...] = acc.astype(o_ref.dtype)


def _pool_reduce_kernel(x_ref, o_ref, *, mode):
    x = x_ref[...].astype(jnp.float32)
    if mode == "max":
        r = jnp.max(x, axis=0, keepdims=True)
    else:
        r = jnp.mean(x, axis=0, keepdims=True)
    o_ref[...] = r.astype(o_ref.dtype)


@functools.partial(jax.jit, static_argnames=("mode", "out_dtype"))
def pool_reduce(stacked, *, mode, out_dtype=jnp.bfloat16):
    """stacked: (KK, P) window-stacked values -> (P,) max/mean over the window axis."""
    KK, P = stacked.shape
    tile = min(32768, _round_up(P, 128))
    Pp = _round_up(P, tile)
    x = jnp.pad(stacked, ((0, 0), (0, Pp - P)))
    out = pl.pallas_call(
        functools.partial(_pool_reduce_kernel, mode=mode),
        out_shape=jax.ShapeDtypeStruct((1, Pp), out_dtype),
        grid=(Pp // tile,),
        in_specs=[pl.BlockSpec((KK, tile), lambda i: (0, i))],
        out_specs=pl.BlockSpec((1, tile), lambda i: (0, i)),
        compiler_params=pltpu.CompilerParams(
            dimension_semantics=("parallel",),
            vmem_limit_bytes=_VMEM_LIMIT),
    )(x)
    return out[0, :P]


def _pool_channel_tile(C):
    if C <= 512:
        return C                       # full dim: allowed even if not 128-aligned
    for cand in (512, 384, 256, 128):  # lane-aligned divisors
        if C % cand == 0:
            return cand
    return 128


@functools.partial(jax.jit, static_argnames=("ksize", "stride", "padding", "mode"))
def pool2d(x, *, ksize, stride, padding, mode):
    # PyTorch semantics: max_pool2d(k,s) / avg_pool2d(k,s,p) count_include_pad=True.
    N, H, W, C = x.shape
    if padding:
        x = jnp.pad(x, ((0, 0), (padding, padding), (padding, padding), (0, 0)))
    Hp, Wp = H + 2 * padding, W + 2 * padding
    Ho = (Hp - ksize) // stride + 1
    Wo = (Wp - ksize) // stride + 1

    if stride == 1:
        # In-kernel windowed pool: no KK-fold HBM stacking.
        tc = _pool_channel_tile(C)
        return pl.pallas_call(
            functools.partial(_pool_window_kernel, ksize=ksize, mode=mode),
            out_shape=jax.ShapeDtypeStruct((N, Ho, Wo, C), x.dtype),
            grid=(N, C // tc),
            in_specs=[pl.BlockSpec((1, Hp, Wp, tc), lambda n, c: (n, 0, 0, c))],
            out_specs=pl.BlockSpec((1, Ho, Wo, tc), lambda n, c: (n, 0, 0, c)),
            compiler_params=pltpu.CompilerParams(
                dimension_semantics=("parallel", "parallel"),
                vmem_limit_bytes=_VMEM_LIMIT),
        )(x)

    # Strided pools (all max, padding=0 in this network): stacked sublane reduce.
    # TODO(synk): a padded strided max pool would need -inf padding (PyTorch
    # semantics); not required here since every strided pool uses padding=0.
    views = []
    for i in range(ksize):
        for j in range(ksize):
            views.append(x[:, i:i + stride * (Ho - 1) + 1:stride,
                              j:j + stride * (Wo - 1) + 1:stride, :])
    stacked = jnp.stack(views, axis=0).reshape(ksize * ksize, -1)
    out = pool_reduce(stacked, mode=mode, out_dtype=x.dtype)
    return out.reshape(N, Ho, Wo, C)


@jax.jit
def global_avg_pool(x):
    """(N, H, W, C) -> (N, C) adaptive avg pool to 1x1 (lane-dense Pallas reduce)."""
    N, H, W, C = x.shape
    cols = x.transpose(1, 2, 0, 3).reshape(H * W, N * C)
    out = pool_reduce(cols, mode="mean", out_dtype=jnp.float32)
    return out.reshape(N, C)


# ----------------------------------------------------------------------------
# Conv / resize wrappers (NHWC glue in plain JAX, compute in Pallas)
# ----------------------------------------------------------------------------

@functools.partial(jax.jit, static_argnames=("kh", "kw", "stride", "padding", "relu"))
def conv2d_bias_act(x, w_mat, bias, *, kh, kw, stride=1, padding=(0, 0), relu=True):
    # x: (N, H, W, C) NHWC; w_mat: (kh*kw*C, O) bf16 in matmul layout.
    N, H, W, C = x.shape
    ph, pw = padding
    if ph or pw:
        x = jnp.pad(x, ((0, 0), (ph, ph), (pw, pw), (0, 0)))
    Hp, Wp = H + 2 * ph, W + 2 * pw
    Ho = (Hp - kh) // stride + 1
    Wo = (Wp - kw) // stride + 1
    x = x.astype(jnp.bfloat16)
    if kh == 1 and kw == 1 and stride == 1:
        a = x.reshape(N * Ho * Wo, C)
    else:
        # TODO(synk): im2col is materialized by XLA (bf16 concat of shifted
        # slices); an in-kernel windowed gather would cut the remaining kh*kw x
        # HBM traffic on these layers.
        views = []
        for i in range(kh):
            for j in range(kw):
                views.append(x[:, i:i + stride * (Ho - 1) + 1:stride,
                                  j:j + stride * (Wo - 1) + 1:stride, :])
        # Channel-last layout: K index = (i*kw + j)*C + c, matching w_mat.
        a = jnp.concatenate(views, axis=-1).reshape(N * Ho * Wo, kh * kw * C)
    y = matmul_bias_act(a, w_mat, bias, relu=relu, out_dtype=jnp.bfloat16)
    return y.reshape(N, Ho, Wo, -1)


def _interp_matrix(in_size, out_size):
    # PyTorch bilinear, align_corners=False source-index convention.
    A = np.zeros((out_size, in_size), dtype=np.float32)
    scale = in_size / out_size
    for o in range(out_size):
        src = (o + 0.5) * scale - 0.5
        if src < 0.0:
            src = 0.0
        i0 = min(int(np.floor(src)), in_size - 1)
        i1 = min(i0 + 1, in_size - 1)
        lam = src - i0
        A[o, i0] += 1.0 - lam
        A[o, i1] += lam
    return A


@functools.partial(jax.jit, static_argnames=("out_h", "out_w"))
def bilinear_resize(x, *, out_h, out_w):
    """F.interpolate(x, (out_h, out_w), mode='bilinear', align_corners=False). NCHW."""
    N, C, H, W = x.shape
    Ah = jnp.asarray(_interp_matrix(H, out_h))
    Aw = jnp.asarray(_interp_matrix(W, out_w))
    # rows: (out_h, H) @ (H, N*C*W)
    x1 = x.transpose(2, 0, 1, 3).reshape(H, N * C * W)
    y1 = matmul_bias_act(Ah, x1, jnp.zeros((N * C * W,), jnp.float32), relu=False)
    y1 = y1.reshape(out_h, N, C, W).transpose(1, 2, 0, 3)   # (N, C, out_h, W)
    # cols: (N*C*out_h, W) @ (W, out_w)
    x2 = y1.reshape(N * C * out_h, W)
    y2 = matmul_bias_act(x2, Aw.T, jnp.zeros((out_w,), jnp.float32), relu=False)
    return y2.reshape(N, C, out_h, out_w)


# ----------------------------------------------------------------------------
# Deterministic synthetic parameters (BasicConv2d = Conv(bias=False)+BN+ReLU)
# ----------------------------------------------------------------------------

_PARAMS = {}
_BN_EPS = 1e-3


def _basic_conv_params(name, cin, cout, kh, kw, input_transform=None):
    if name not in _PARAMS:
        rng = np.random.default_rng(zlib.crc32(name.encode("utf-8")))
        fan_in = cin * kh * kw
        w = (rng.standard_normal((cout, cin, kh, kw)).astype(np.float32)
             * np.sqrt(2.0 / fan_in))
        gamma = np.ones((cout,), np.float32)
        beta = np.zeros((cout,), np.float32)
        r_mean = np.zeros((cout,), np.float32)
        r_var = np.ones((cout,), np.float32)
        # Fold eval-mode BatchNorm(eps=1e-3) into conv weight + bias.
        scale = gamma / np.sqrt(r_var + _BN_EPS)
        w_f = w * scale[:, None, None, None]
        b_f = beta - r_mean * scale
        if input_transform is not None:
            # Fold the per-input-channel affine x*s + t (_transform_input) into
            # the conv (both linear): w <- w*s[c]; b <- b + sum_{c,i,j} w*t[c].
            s, t = input_transform
            b_f = b_f + np.einsum("ocij,c->o", w_f, t.astype(np.float32))
            w_f = w_f * s.astype(np.float32)[None, :, None, None]
        # NHWC-im2col matmul layout: (kh*kw*cin, cout), K = (i*kw + j)*cin + c.
        w_mat = np.transpose(w_f, (2, 3, 1, 0)).reshape(kh * kw * cin, cout)
        _PARAMS[name] = (jnp.asarray(w_mat, dtype=jnp.bfloat16),
                         jnp.asarray(b_f))
    return _PARAMS[name]


def basic_conv2d(x, name, cin, cout, ksize, stride=1, padding=0,
                 input_transform=None):
    kh, kw = (ksize, ksize) if isinstance(ksize, int) else ksize
    if isinstance(padding, int):
        padding = (padding, padding)
    w_mat, b = _basic_conv_params(name, cin, cout, kh, kw, input_transform)
    return conv2d_bias_act(x, w_mat, b, kh=kh, kw=kw, stride=stride,
                           padding=padding, relu=True)


# ----------------------------------------------------------------------------
# InceptionV3 blocks (torchvision architecture, eval mode, NHWC)
# ----------------------------------------------------------------------------

def inception_a(x, name, cin, pool_features):
    b1 = basic_conv2d(x, name + ".branch1x1", cin, 64, 1)
    b5 = basic_conv2d(x, name + ".branch5x5_1", cin, 48, 1)
    b5 = basic_conv2d(b5, name + ".branch5x5_2", 48, 64, 5, padding=2)
    bd = basic_conv2d(x, name + ".branch3x3dbl_1", cin, 64, 1)
    bd = basic_conv2d(bd, name + ".branch3x3dbl_2", 64, 96, 3, padding=1)
    bd = basic_conv2d(bd, name + ".branch3x3dbl_3", 96, 96, 3, padding=1)
    bp = pool2d(x, ksize=3, stride=1, padding=1, mode="avg")
    bp = basic_conv2d(bp, name + ".branch_pool", cin, pool_features, 1)
    return jnp.concatenate([b1, b5, bd, bp], axis=-1)


def inception_b(x, name, cin):
    b3 = basic_conv2d(x, name + ".branch3x3", cin, 384, 3, stride=2)
    bd = basic_conv2d(x, name + ".branch3x3dbl_1", cin, 64, 1)
    bd = basic_conv2d(bd, name + ".branch3x3dbl_2", 64, 96, 3, padding=1)
    bd = basic_conv2d(bd, name + ".branch3x3dbl_3", 96, 96, 3, stride=2)
    bp = pool2d(x, ksize=3, stride=2, padding=0, mode="max")
    return jnp.concatenate([b3, bd, bp], axis=-1)


def inception_c(x, name, cin, c7):
    b1 = basic_conv2d(x, name + ".branch1x1", cin, 192, 1)
    b7 = basic_conv2d(x, name + ".branch7x7_1", cin, c7, 1)
    b7 = basic_conv2d(b7, name + ".branch7x7_2", c7, c7, (1, 7), padding=(0, 3))
    b7 = basic_conv2d(b7, name + ".branch7x7_3", c7, 192, (7, 1), padding=(3, 0))
    bd = basic_conv2d(x, name + ".branch7x7dbl_1", cin, c7, 1)
    bd = basic_conv2d(bd, name + ".branch7x7dbl_2", c7, c7, (7, 1), padding=(3, 0))
    bd = basic_conv2d(bd, name + ".branch7x7dbl_3", c7, c7, (1, 7), padding=(0, 3))
    bd = basic_conv2d(bd, name + ".branch7x7dbl_4", c7, c7, (7, 1), padding=(3, 0))
    bd = basic_conv2d(bd, name + ".branch7x7dbl_5", c7, 192, (1, 7), padding=(0, 3))
    bp = pool2d(x, ksize=3, stride=1, padding=1, mode="avg")
    bp = basic_conv2d(bp, name + ".branch_pool", cin, 192, 1)
    return jnp.concatenate([b1, b7, bd, bp], axis=-1)


def inception_d(x, name, cin):
    b3 = basic_conv2d(x, name + ".branch3x3_1", cin, 192, 1)
    b3 = basic_conv2d(b3, name + ".branch3x3_2", 192, 320, 3, stride=2)
    b7 = basic_conv2d(x, name + ".branch7x7x3_1", cin, 192, 1)
    b7 = basic_conv2d(b7, name + ".branch7x7x3_2", 192, 192, (1, 7), padding=(0, 3))
    b7 = basic_conv2d(b7, name + ".branch7x7x3_3", 192, 192, (7, 1), padding=(3, 0))
    b7 = basic_conv2d(b7, name + ".branch7x7x3_4", 192, 192, 3, stride=2)
    bp = pool2d(x, ksize=3, stride=2, padding=0, mode="max")
    return jnp.concatenate([b3, b7, bp], axis=-1)


def inception_e(x, name, cin):
    b1 = basic_conv2d(x, name + ".branch1x1", cin, 320, 1)
    b3 = basic_conv2d(x, name + ".branch3x3_1", cin, 384, 1)
    b3a = basic_conv2d(b3, name + ".branch3x3_2a", 384, 384, (1, 3), padding=(0, 1))
    b3b = basic_conv2d(b3, name + ".branch3x3_2b", 384, 384, (3, 1), padding=(1, 0))
    b3 = jnp.concatenate([b3a, b3b], axis=-1)
    bd = basic_conv2d(x, name + ".branch3x3dbl_1", cin, 448, 1)
    bd = basic_conv2d(bd, name + ".branch3x3dbl_2", 448, 384, 3, padding=1)
    bda = basic_conv2d(bd, name + ".branch3x3dbl_3a", 384, 384, (1, 3), padding=(0, 1))
    bdb = basic_conv2d(bd, name + ".branch3x3dbl_3b", 384, 384, (3, 1), padding=(1, 0))
    bd = jnp.concatenate([bda, bdb], axis=-1)
    bp = pool2d(x, ksize=3, stride=1, padding=1, mode="avg")
    bp = basic_conv2d(bp, name + ".branch_pool", cin, 192, 1)
    return jnp.concatenate([b1, b3, bd, bp], axis=-1)


# ----------------------------------------------------------------------------
# FIDInceptionV3.forward
# ----------------------------------------------------------------------------

def fid_inception_v3_forward(x):
    # x: (N, 3, H, W) f32 -> (N, 2048) pooled features (fc = Identity).
    # TODO(synk): torchvision's pretrained checkpoint cannot be loaded here;
    # deterministic He-initialized weights are used, BN/dropout run in eval
    # mode and the training-only AuxLogits branch is omitted.
    x = bilinear_resize(x, out_h=299, out_w=299)       # (N, 3, 299, 299), bf16
    x = x.transpose(0, 2, 3, 1)                        # NHWC for the rest

    # Inception3._transform_input (enabled with weights='DEFAULT') is folded
    # directly into Conv2d_1a's weights/bias below (conv is linear).
    in_scale = np.array([0.229, 0.224, 0.225], np.float32) / 0.5
    in_shift = (np.array([0.485, 0.456, 0.406], np.float32) - 0.5) / 0.5

    x = basic_conv2d(x, "Conv2d_1a_3x3", 3, 32, 3, stride=2,
                     input_transform=(in_scale, in_shift))
    x = basic_conv2d(x, "Conv2d_2a_3x3", 32, 32, 3)
    x = basic_conv2d(x, "Conv2d_2b_3x3", 32, 64, 3, padding=1)
    x = pool2d(x, ksize=3, stride=2, padding=0, mode="max")
    x = basic_conv2d(x, "Conv2d_3b_1x1", 64, 80, 1)
    x = basic_conv2d(x, "Conv2d_4a_3x3", 80, 192, 3)
    x = pool2d(x, ksize=3, stride=2, padding=0, mode="max")
    x = inception_a(x, "Mixed_5b", 192, 32)
    x = inception_a(x, "Mixed_5c", 256, 64)
    x = inception_a(x, "Mixed_5d", 288, 64)
    x = inception_b(x, "Mixed_6a", 288)
    x = inception_c(x, "Mixed_6b", 768, 128)
    x = inception_c(x, "Mixed_6c", 768, 160)
    x = inception_c(x, "Mixed_6d", 768, 160)
    x = inception_c(x, "Mixed_6e", 768, 192)
    x = inception_d(x, "Mixed_7a", 768)
    x = inception_e(x, "Mixed_7b", 1280)
    x = inception_e(x, "Mixed_7c", 2048)
    # AdaptiveAvgPool2d(1) -> Dropout(eval: identity) -> flatten -> fc=Identity
    return global_avg_pool(x)


if __name__ == "__main__":
    key = jax.random.PRNGKey(0)
    x = jax.random.normal(key, (2, 3, 16, 16), dtype=jnp.float32)
    feats = fid_inception_v3_forward(x)
    feats = jax.block_until_ready(feats)
    assert feats.shape == (2, 2048), feats.shape
    assert bool(jnp.all(jnp.isfinite(feats)))
    print("KERNEL_OK")
</pallas_src>

<mosaic_0001>
module attributes {stable_mosaic.version = 11 : i64} {
  func.func @_mm_single_kernel(%arg0: i32, %arg1: i32, %arg2: memref<256x16xbf16, #tpu.memory_space<vmem>>, %arg3: memref<16x128xbf16, #tpu.memory_space<vmem>>, %arg4: memref<1x128xf32, #tpu.memory_space<vmem>>, %arg5: memref<256x128xbf16, #tpu.memory_space<vmem>>) attributes {dimension_semantics = [#tpu.dimension_semantics<parallel>, #tpu.dimension_semantics<parallel>], iteration_bounds = array<i64: 2, 1>, scalar_prefetch = 0 : i64, scratch_operands = 0 : i64, tpu.core_type = #tpu.core_type<tc>, window_params = [{transform_indices = @transform_0, window_bounds = array<i64: 256, 16>}, {transform_indices = @transform_1, window_bounds = array<i64: 16, 128>}, {transform_indices = @transform_2, window_bounds = array<i64: 1, 128>}, {transform_indices = @transform_3, window_bounds = array<i64: 256, 128>}]} {
    %c0 = arith.constant 0 : index
    %c0_0 = arith.constant 0 : index
    %0 = vector.load %arg2[%c0, %c0_0] : memref<256x16xbf16, #tpu.memory_space<vmem>>, vector<256x16xbf16>
    %c0_1 = arith.constant 0 : index
    %c0_2 = arith.constant 0 : index
    %1 = vector.load %arg3[%c0_1, %c0_2] : memref<16x128xbf16, #tpu.memory_space<vmem>>, vector<16x128xbf16>
    %cst = arith.constant dense<0.000000e+00> : vector<256x128xf32>
    %2 = tpu.matmul %0, %1, %cst {dimension_numbers = #tpu.dot_dimension_numbers<[1], [0], [0], [1], [0, 0, 1, 1], [], []>} : vector<256x16xbf16>, vector<16x128xbf16>, vector<256x128xf32> -> vector<256x128xf32>
    %c0_3 = arith.constant 0 : index
    %c0_4 = arith.constant 0 : index
    %3 = vector.load %arg4[%c0_3, %c0_4] : memref<1x128xf32, #tpu.memory_space<vmem>>, vector<1x128xf32>
    %4 = vector.broadcast %3 : vector<1x128xf32> to vector<256x128xf32>
    %5 = arith.addf %2, %4 : vector<256x128xf32>
    %6 = arith.truncf %5 : vector<256x128xf32> to vector<256x128xbf16>
    %c0_5 = arith.constant 0 : index
    %c0_6 = arith.constant 0 : index
    %7 = vector.load %arg5[%c0_5, %c0_6] : memref<256x128xbf16, #tpu.memory_space<vmem>>, vector<256x128xbf16>
    tpu.vector_store %arg5[%c0_5, %c0_6], %6 {strides = array<i32>} : memref<256x128xbf16, #tpu.memory_space<vmem>>, vector<256x128xbf16>,
    return
  }
  func.func @transform_0(%arg0: i32, %arg1: i32) -> (i32, i32) {
    %c0_i32 = arith.constant 0 : i32
    %c0_i32_0 = arith.constant 0 : i32
    return %arg0, %c0_i32 : i32, i32
  }
  func.func @transform_1(%arg0: i32, %arg1: i32) -> (i32, i32) {
    %c0_i32 = arith.constant 0 : i32
    %c0_i32_0 = arith.constant 0 : i32
    return %c0_i32, %arg1 : i32, i32
  }
  func.func @transform_2(%arg0: i32, %arg1: i32) -> (i32, i32) {
    %c0_i32 = arith.constant 0 : i32
    %c0_i32_0 = arith.constant 0 : i32
    return %c0_i32, %arg1 : i32, i32
  }
  func.func @transform_3(%arg0: i32, %arg1: i32) -> (i32, i32) {
    %c0_i32 = arith.constant 0 : i32
    return %arg0, %arg1 : i32, i32
  }
}

</mosaic_0001>

<llo_original>
// kernel: matmul_bias_act.1
$region0: #{matmul_bias_act.1}
  #allocation0 [shape = 'u32[]', space=smem, size = 0x4, offset = 0x4, fixed_abs, tag = 'smem constant byte address 0x4 - core index']
  #allocation1 [shape = 'u32[144,128]{1,0:T(1,128)}', space=vmem, size = 0x12000, scoped, tag = 'internal scratch']
  %s0 = inlined_call_operand.vmem [shape: bf16[512,16], index: 0, kind: input, shape index: {}]
  %s1 = inlined_call_operand.vmem [shape: bf16[16,128], index: 1, kind: input, shape index: {}]
  %s2 = inlined_call_operand.vmem [shape: f32[1,128], index: 2, kind: input, shape index: {}]
  %s3 = inlined_call_operand.vmem [shape: bf16[512,128], index: 3, kind: output, shape index: {}]
  %s4 = sld [smem:[#allocation0]]
  $region45: #{matmul_bias_act.1} parent=0
    _
  %s6 = ssub.s32 1, %s4
  %s7 = scalar_select 0, %s6, %s4
  loop: start=0, step=1, limit=4
  $region2: #{matmul_bias_act.1} parent=0 // loop_pre_header
    _
  $region3: #{matmul_bias_act.1} parent=0 // loop_header
    %s9 = sphi 0, %s13
    %p10 = scmp.ge.s32.totalorder %s9, 4
    %s16 = sphi 0, %s28
    %s17 = sphi 0, %s24
    %s18 = sphi 0, %s16
    %s19 = sphi 0, %s17
    %s20 = sphi 0, %s18
    %s21 = sphi 0, %s19
    %s31 = sphi 0, %s33
    %s34 = sphi 0, %s31
    %s35 = sphi 0, %s34
    %s51 = sphi 0, %s35
    %s57 = sphi 0, %s59
    %s60 = sphi 0, %s57
    %s61 = sphi 0, %s60
    %s77 = sphi 0, %s61
    %s83 = sphi 0, %s85
    %s86 = sphi 0, %s83
    %s87 = sphi 0, %s86
    %s103 = sphi 0, %s87
    %s111 = sphi 0, %s113
    %s114 = sphi 0, %s111
    %s115 = sphi 0, %s114
    %s131 = sphi 0, %s115
  $region4: #{matmul_bias_act.1} parent=0 // loop_header_branch
    %12 = sbr.rel (%p10) target = $region8
  $region5: #{matmul_bias_act.1} parent=0 // loop_body
    %s14 = ssub.s32 %s9, 1
    %s15 = ssub.s32 %s9, 2
    %s22 = sadd.s32 1, %s17
    %p23 = scmp.ge.s32.totalorder %s22, 1
    %s24 = scalar_select %p23, 0, %s22
    %s25 = sadd.s32 1, %s16
    %s26 = scalar_select %p23, %s25, %s16
    %p27 = scmp.ge.s32.totalorder %s26, 2
    %s28 = scalar_select %p27, 0, %s26
    %s29 = ssub.s32 %s16, %s28
    %p30 = scmp.eq.s32.totalorder %s29, 0
    %s32 = sadd.s32 %s31, 1
    %s33 = scalar_select %p30, %s31, %s32
    %p36 = pneg %p30
    %p37 = scmp.eq.s32.totalorder %s9, 1
    %p38 = por %p36, %p37
    %p39 = scmp.ne.s32.totalorder %s31, %s34
    %p40 = scmp.eq.s32.totalorder %s9, 0
    %p41 = por %p39, %p40
    %p42 = scmp.ne.s32.totalorder %s31, %s34
    %p43 = scmp.eq.s32.totalorder %s14, 1
    %p44 = por %p42, %p43
    %p45 = scmp.ne.s32.totalorder %s34, %s35
    %p46 = scmp.eq.s32.totalorder %s14, 0
    %p47 = por %p45, %p46
    %p48 = scmp.ne.s32.totalorder %s34, %s35
    %p49 = scmp.eq.s32.totalorder %s15, 1
    %p50 = por %p48, %p49
    %p52 = scmp.ne.s32.totalorder %s35, %s51
    %p53 = scmp.eq.s32.totalorder %s15, 0
    %p54 = por %p52, %p53
    %s55 = ssub.s32 %s17, %s24
    %p56 = scmp.eq.s32.totalorder %s55, 0
    %s58 = sadd.s32 %s57, 1
    %s59 = scalar_select %p56, %s57, %s58
    %p62 = pneg %p56
    %p63 = scmp.eq.s32.totalorder %s9, 1
    %p64 = por %p62, %p63
    %p65 = scmp.ne.s32.totalorder %s57, %s60
    %p66 = scmp.eq.s32.totalorder %s9, 0
    %p67 = por %p65, %p66
    %p68 = scmp.ne.s32.totalorder %s57, %s60
    %p69 = scmp.eq.s32.totalorder %s14, 1
    %p70 = por %p68, %p69
    %p71 = scmp.ne.s32.totalorder %s60, %s61
    %p72 = scmp.eq.s32.totalorder %s14, 0
    %p73 = por %p71, %p72
    %p74 = scmp.ne.s32.totalorder %s60, %s61
    %p75 = scmp.eq.s32.totalorder %s15, 1
    %p76 = por %p74, %p75
    %p78 = scmp.ne.s32.totalorder %s61, %s77
    %p79 = scmp.eq.s32.totalorder %s15, 0
    %p80 = por %p78, %p79
    %s81 = ssub.s32 %s17, %s24
    %p82 = scmp.eq.s32.totalorder %s81, 0
    %s84 = sadd.s32 %s83, 1
    %s85 = scalar_select %p82, %s83, %s84
    %p88 = pneg %p82
    %p89 = scmp.eq.s32.totalorder %s9, 1
    %p90 = por %p88, %p89
    %p91 = scmp.ne.s32.totalorder %s83, %s86
    %p92 = scmp.eq.s32.totalorder %s9, 0
    %p93 = por %p91, %p92
    %p94 = scmp.ne.s32.totalorder %s83, %s86
    %p95 = scmp.eq.s32.totalorder %s14, 1
    %p96 = por %p94, %p95
    %p97 = scmp.ne.s32.totalorder %s86, %s87
    %p98 = scmp.eq.s32.totalorder %s14, 0
    %p99 = por %p97, %p98
    %p100 = scmp.ne.s32.totalorder %s86, %s87
    %p101 = scmp.eq.s32.totalorder %s15, 1
    %p102 = por %p100, %p101
    %p104 = scmp.ne.s32.totalorder %s87, %s103
    %p105 = scmp.eq.s32.totalorder %s15, 0
    %p106 = por %p104, %p105
    %s107 = ssub.s32 %s16, %s28
    %s108 = ssub.s32 %s17, %s24
    %s109 = sor.u32 %s107, %s108
    %p110 = scmp.eq.s32.totalorder %s109, 0
    %s112 = sadd.s32 %s111, 1
    %s113 = scalar_select %p110, %s111, %s112
    %p116 = pneg %p110
    %p117 = scmp.eq.s32.totalorder %s9, 1
    %p118 = por %p116, %p117
    %p119 = scmp.ne.s32.totalorder %s111, %s114
    %p120 = scmp.eq.s32.totalorder %s9, 0
    %p121 = por %p119, %p120
    %p122 = scmp.ne.s32.totalorder %s111, %s114
    %p123 = scmp.eq.s32.totalorder %s14, 1
    %p124 = por %p122, %p123
    %p125 = scmp.ne.s32.totalorder %s114, %s115
    %p126 = scmp.eq.s32.totalorder %s14, 0
    %p127 = por %p125, %p126
    %p128 = scmp.ne.s32.totalorder %s114, %s115
    %p129 = scmp.eq.s32.totalorder %s15, 1
    %p130 = por %p128, %p129
    %p132 = scmp.ne.s32.totalorder %s115, %s131
    %p133 = scmp.eq.s32.totalorder %s15, 0
    %p134 = por %p132, %p133
    %p135 = scmp.le.s32.totalorder 1, %s9
    %p136 = scmp.lt.s32.totalorder %s9, 3
    %p137 = pnand %p135, %p136
    %p138 = pneg %p137
    // Predicated region
    $region9: #{matmul_bias_act.1} parent=5 // pred_check
      _
    $region10: #{matmul_bias_act.1} parent=5 // pred_check_branch
      %140 = sbr.rel (%p137) target = $region12
    $region11: #{matmul_bias_act.1} parent=5 // pred_region
      %s141 = ssub.s32 %s9, 1
      // Predicated region
      $region13: #{matmul_bias_act.1} parent=11 // pred_check
        %p142 = pneg %p73
      $region14: #{matmul_bias_act.1} parent=11 // pred_check_branch
        %144 = sbr.rel (%p142) target = $region16
      $region15: #{matmul_bias_act.1} parent=11 // pred_region
        %p145 = scmp.lt.s32.totalorder %s19, 0
        %s146 = scalar_select %p145, %s19, 0
        %s147 = smul.addr %s146, 4
        %s148 = scalar_lea.vmem %s1, %s147
      $region16: #{matmul_bias_act.1} parent=11 // pred_fallthru
        _
      // Predicated region
      $region17: #{matmul_bias_act.1} parent=11 // pred_check
        %p149 = pneg %p99
      $region18: #{matmul_bias_act.1} parent=11 // pred_check_branch
        %151 = sbr.rel (%p149) target = $region20
      $region19: #{matmul_bias_act.1} parent=11 // pred_region
        %p152 = scmp.lt.s32.totalorder %s19, 0
        %s153 = scalar_select %p152, %s19, 0
        %s154 = scalar_lea.vmem %s2, %s153
      $region20: #{matmul_bias_act.1} parent=11 // pred_fallthru
        _
    $region12: #{matmul_bias_act.1} parent=5 // pred_fallthru
      _
    %p155 = scmp.lt.s32.totalorder %s9, 2
    // Predicated region
    $region21: #{matmul_bias_act.1} parent=5 // pred_check
      %p156 = pneg %p155
    $region22: #{matmul_bias_act.1} parent=5 // pred_check_branch
      %158 = sbr.rel (%p156) target = $region24
    $region23: #{matmul_bias_act.1} parent=5 // pred_region
      // Predicated region
      $region25: #{matmul_bias_act.1} parent=23 // pred_check
        %p159 = pneg %p41
      $region26: #{matmul_bias_act.1} parent=23 // pred_check_branch
        %161 = sbr.rel (%p159) target = $region28
      $region27: #{matmul_bias_act.1} parent=23 // pred_region
        %s162 = smul.u32 32, %s16
        %p163 = scmp.lt.s32.totalorder %s162, 63
        %s164 = scalar_select %p163, %s162, 63
        %s165 = smul.addr %s164, 4
        %s166 = scalar_lea.vmem %s0, %s165
        %s167 = smul.u32 32, %s16
      $region28: #{matmul_bias_act.1} parent=23 // pred_fallthru
        _
    $region24: #{matmul_bias_act.1} parent=5 // pred_fallthru
      _
    %p168 = scmp.le.s32.totalorder 1, %s9
    %p169 = scmp.lt.s32.totalorder %s9, 3
    %p170 = pnand %p168, %p169
    %p171 = pneg %p170
    // Predicated region
    $region29: #{matmul_bias_act.1} parent=5 // pred_check
      _
    $region30: #{matmul_bias_act.1} parent=5 // pred_check_branch
      %173 = sbr.rel (%p170) target = $region32
    $region31: #{matmul_bias_act.1} parent=5 // pred_region
      %s174 = ssub.s32 %s9, 1
      %s175 = smul.u32 32, %s18
      %p176 = scmp.lt.s32.totalorder %s175, 63
      %s177 = scalar_select %p176, %s175, 63
      %s178 = smul.addr %s177, 4
      %s179 = scalar_lea.vmem %s0, %s178
      %p180 = pneg %p47
      %p181 = pneg %p44
      %p182 = scmp.lt.s32.totalorder %s19, 0
      %s183 = scalar_select %p182, %s19, 0
      %s184 = smul.addr %s183, 4
      %s185 = scalar_lea.vmem %s1, %s184
      %p186 = pneg %p73
      %p187 = pneg %p70
      %p188 = scmp.lt.s32.totalorder %s19, 0
      %s189 = scalar_select %p188, %s19, 0
      %s190 = scalar_lea.vmem %s2, %s189
      %p191 = pneg %p99
      %p192 = pneg %p96
      %p193 = pneg %p127
      %p194 = pneg %p124
      %s195 = smul.u32 32, %s18
      %p196 = scmp.lt.s32.totalorder %s195, 63
      %s197 = scalar_select %p196, %s195, 63
      %p198 = scmp.lt.s32.totalorder %s19, 0
      %s199 = scalar_select %p198, %s19, 0
      %s200 = sadd.s32 %s199, %s197
      %s201 = smul.addr %s200, 4
      %s202 = scalar_lea.vmem %s3, %s201
      %s203 = smul.u32 32, %s18
      %p204 = scmp.lt.s32.totalorder %s203, 63
      %s205 = scalar_select %p204, %s203, 63
      %s206 = smul.addr %s205, 4
      %s207 = scalar_lea.vmem %s0, %s206
      %s208 = smul.u32 32, %s18
      %p209 = scmp.lt.s32.totalorder %s19, 0
      %s210 = scalar_select %p209, %s19, 0
      %s211 = smul.addr %s210, 4
      %s212 = scalar_lea.vmem %s1, %s211
      %p213 = scmp.lt.s32.totalorder %s19, 0
      %s214 = scalar_select %p213, %s19, 0
      %s215 = scalar_lea.vmem %s2, %s214
      %s216 = smul.u32 32, %s18
      %p217 = scmp.lt.s32.totalorder %s216, 63
      %s218 = scalar_select %p217, %s216, 63
      %p219 = scmp.lt.s32.totalorder %s19, 0
      %s220 = scalar_select %p219, %s19, 0
      %s221 = sadd.s32 %s220, %s218
      %s222 = smul.addr %s221, 4
      %s223 = scalar_lea.vmem %s3, %s222
      %s224 = smul.u32 32, %s18
      %v226 = vld [vmem:[%s207] sm:$0xf]
      %v227 = vld [vmem:[%s207 + $0x4] sm:$0xf]
      %v228 = vld [vmem:[%s207 + $0x8] sm:$0xf]
      %v229 = vld [vmem:[%s207 + $0xc] sm:$0xf]
      %v230 = vld [vmem:[%s207 + $0x10] sm:$0xf]
      %v231 = vld [vmem:[%s207 + $0x14] sm:$0xf]
      %v232 = vld [vmem:[%s207 + $0x18] sm:$0xf]
      %v233 = vld [vmem:[%s207 + $0x1c] sm:$0xf]
      %v234 = vld [vmem:[%s207 + $0x20] sm:$0xf]
      %v235 = vld [vmem:[%s207 + $0x24] sm:$0xf]
      %v236 = vld [vmem:[%s207 + $0x28] sm:$0xf]
      %v237 = vld [vmem:[%s207 + $0x2c] sm:$0xf]
      %v238 = vld [vmem:[%s207 + $0x30] sm:$0xf]
      %v239 = vld [vmem:[%s207 + $0x34] sm:$0xf]
      %v240 = vld [vmem:[%s207 + $0x38] sm:$0xf]
      %v241 = vld [vmem:[%s207 + $0x3c] sm:$0xf]
      %v242 = vld [vmem:[%s207 + $0x40] sm:$0xf]
      %v243 = vld [vmem:[%s207 + $0x44] sm:$0xf]
      %v244 = vld [vmem:[%s207 + $0x48] sm:$0xf]
      %v245 = vld [vmem:[%s207 + $0x4c] sm:$0xf]
      %v246 = vld [vmem:[%s207 + $0x50] sm:$0xf]
      %v247 = vld [vmem:[%s207 + $0x54] sm:$0xf]
      %v248 = vld [vmem:[%s207 + $0x58] sm:$0xf]
      %v249 = vld [vmem:[%s207 + $0x5c] sm:$0xf]
      %v250 = vld [vmem:[%s207 + $0x60] sm:$0xf]
      %v251 = vld [vmem:[%s207 + $0x64] sm:$0xf]
      %v252 = vld [vmem:[%s207 + $0x68] sm:$0xf]
      %v253 = vld [vmem:[%s207 + $0x6c] sm:$0xf]
      %v254 = vld [vmem:[%s207 + $0x70] sm:$0xf]
      %v255 = vld [vmem:[%s207 + $0x74] sm:$0xf]
      %v256 = vld [vmem:[%s207 + $0x78] sm:$0xf]
      %v257 = vld [vmem:[%s207 + $0x7c] sm:$0xf]
      %v258 = vld [vmem:[%s212] sm:$0xf]
      %v259 = vld [vmem:[%s212 + $0x4] sm:$0xf]
      %v260 = vld [vmem:[%s215] sm:$0x1]
      %v262 = vlaneseq
      %v263 = vshrl.u32 %v262, 7
      %v264 = vsub.s32 0, %v263
      %v265 = vrot.slane %v260, %v264
      %v299 = vunpack.c.l.b16 %v226
      %v300 = vunpack.c.l.b16 %v227
      %v301 = vunpack.c.l.b16 %v228
      %v302 = vunpack.c.l.b16 %v229
      %v303 = vunpack.c.l.b16 %v230
      %v304 = vunpack.c.l.b16 %v231
      %v305 = vunpack.c.l.b16 %v232
      %v306 = vunpack.c.l.b16 %v233
      %v307 = vunpack.c.l.b16 %v234
      %v308 = vunpack.c.l.b16 %v235
      %v309 = vunpack.c.l.b16 %v236
      %v310 = vunpack.c.l.b16 %v237
      %v311 = vunpack.c.l.b16 %v238
      %v312 = vunpack.c.l.b16 %v239
      %v313 = vunpack.c.l.b16 %v240
      %v314 = vunpack.c.l.b16 %v241
      %v315 = vunpack.c.l.b16 %v242
      %v316 = vunpack.c.l.b16 %v243
      %v317 = vunpack.c.l.b16 %v244
      %v318 = vunpack.c.l.b16 %v245
      %v319 = vunpack.c.l.b16 %v246
      %v320 = vunpack.c.l.b16 %v247
      %v321 = vunpack.c.l.b16 %v248
      %v322 = vunpack.c.l.b16 %v249
      %v323 = vunpack.c.l.b16 %v250
      %v324 = vunpack.c.l.b16 %v251
      %v325 = vunpack.c.l.b16 %v252
      %v326 = vunpack.c.l.b16 %v253
      %v327 = vunpack.c.l.b16 %v254
      %v328 = vunpack.c.l.b16 %v255
      %v329 = vunpack.c.l.b16 %v256
      %v330 = vunpack.c.l.b16 %v257
      %v331 = vpack.c.b16 %v300, %v299
      %v332 = vpack.c.b16 %v302, %v301
      %v333 = vpack.c.b16 %v304, %v303
      %v334 = vpack.c.b16 %v306, %v305
      %v335 = vpack.c.b16 %v308, %v307
      %v336 = vpack.c.b16 %v310, %v309
      %v337 = vpack.c.b16 %v312, %v311
      %v338 = vpack.c.b16 %v314, %v313
      %v339 = vpack.c.b16 %v316, %v315
      %v340 = vpack.c.b16 %v318, %v317
      %v341 = vpack.c.b16 %v320, %v319
      %v342 = vpack.c.b16 %v322, %v321
      %v343 = vpack.c.b16 %v324, %v323
      %v344 = vpack.c.b16 %v326, %v325
      %v345 = vpack.c.b16 %v328, %v327
      %v346 = vpack.c.b16 %v330, %v329
      %v349 = vunpack.c.l.b16 %v258
      %v350 = vunpack.c.l.b16 %v259
      %v351 = vpack.c.b16 %v350, %v349
      %vm353 = vcmask 130048
      %v355 = vsel %vm353, %v331, 0
      %v358 = vsel %vm353, %v332, 0
      %v361 = vsel %vm353, %v333, 0
      %v364 = vsel %vm353, %v334, 0
      %v367 = vsel %vm353, %v335, 0
      %v370 = vsel %vm353, %v336, 0
      %v373 = vsel %vm353, %v337, 0
      %v376 = vsel %vm353, %v338, 0
      %v379 = vsel %vm353, %v339, 0
      %v382 = vsel %vm353, %v340, 0
      %v385 = vsel %vm353, %v341, 0
      %v388 = vsel %vm353, %v342, 0
      %v391 = vsel %vm353, %v343, 0
      %v394 = vsel %vm353, %v344, 0
      %v397 = vsel %vm353, %v345, 0
      %v400 = vsel %vm353, %v346, 0
      %402 = vmatprep.subr.bf16.mxu0 0
      %403 = vmatpush1.bf16.msra.mxu0 0
      %404 = vmatprep.subr.bf16.mxu0 0
      %405 = vmatpush1.bf16.msra.mxu0 0
      %406 = vmatprep.subr.bf16.mxu0 0
      %407 = vmatpush1.bf16.msra.mxu0 0
      %408 = vmatprep.subr.bf16.mxu0 0
      %409 = vmatpush1.bf16.msra.mxu0 0
      %410 = vmatprep.subr.bf16.mxu0 0
      %411 = vmatpush1.bf16.msra.mxu0 0
      %412 = vmatprep.subr.bf16.mxu0 0
      %413 = vmatpush1.bf16.msra.mxu0 0
      %414 = vmatprep.subr.bf16.mxu0 0
      %415 = vmatpush1.bf16.msra.mxu0 0
      %416 = vmatprep.subr.bf16.mxu0 0
      %417 = vmatpush1.bf16.msra.mxu0 %v351
      %418 = vmatprep.subr.bf16.mxu0 0
      %419 = vmatpush2.bf16.msra.mxu0 0
      %420 = vmatprep.subr.bf16.mxu0 0
      %421 = vmatpush2.bf16.msra.mxu0 0
      %422 = vmatprep.subr.bf16.mxu0 0
      %423 = vmatpush2.bf16.msra.mxu0 0
      %424 = vmatprep.subr.bf16.mxu0 0
      %425 = vmatpush2.bf16.msra.mxu0 0
      %426 = vmatprep.subr.bf16.mxu0 0
      %427 = vmatpush2.bf16.msra.mxu0 0
      %428 = vmatprep.subr.bf16.mxu0 0
      %429 = vmatpush2.bf16.msra.mxu0 0
      %430 = vmatprep.subr.bf16.mxu0 0
      %431 = vmatpush2.bf16.msra.mxu0 0
      %432 = vmatprep.subr.bf16.mxu0 0
      %433 = vmatpush2.bf16.msra.mxu0 0
      %434 = vmatprep.mubr.bf16.mxu0 0
      %435 = vmatmul.mubr.bf16.gmra.mxu0 %v355
      %v436 = vpop.f32.mrf.mxu0
      %v437 = vadd.f32 %v265, %v436
      %v438 = vpop.f32.mrf.mxu0
      %v439 = vpop.f32.mrf.mxu0
      %v440 = vadd.f32 %v265, %v439
      %v441 = vpop.f32.mrf.mxu0
      %442 = vmatprep.mubr.bf16.mxu0 0
      %443 = vmatmul.mubr.bf16.gmra.mxu0 %v358
      %v444 = vpop.f32.mrf.mxu0
      %v445 = vadd.f32 %v265, %v444
      %v446 = vpop.f32.mrf.mxu0
      %v447 = vpop.f32.mrf.mxu0
      %v448 = vadd.f32 %v265, %v447
      %v449 = vpop.f32.mrf.mxu0
      %450 = vmatprep.mubr.bf16.mxu0 0
      %451 = vmatmul.mubr.bf16.gmra.mxu0 %v361
      %v452 = vpop.f32.mrf.mxu0
      %v453 = vadd.f32 %v265, %v452
      %v454 = vpop.f32.mrf.mxu0
      %v455 = vpop.f32.mrf.mxu0
      %v456 = vadd.f32 %v265, %v455
      %v457 = vpop.f32.mrf.mxu0
      %458 = vmatprep.mubr.bf16.mxu0 0
      %459 = vmatmul.mubr.bf16.gmra.mxu0 %v364
      %v460 = vpop.f32.mrf.mxu0
      %v461 = vadd.f32 %v265, %v460
      %v462 = vpop.f32.mrf.mxu0
      %v463 = vpop.f32.mrf.mxu0
      %v464 = vadd.f32 %v265, %v463
      %v465 = vpop.f32.mrf.mxu0
      %466 = vmatprep.mubr.bf16.mxu0 0
      %467 = vmatmul.mubr.bf16.gmra.mxu0 %v367
      %v468 = vpop.f32.mrf.mxu0
      %v469 = vadd.f32 %v265, %v468
      %v470 = vpop.f32.mrf.mxu0
      %v471 = vpop.f32.mrf.mxu0
      %v472 = vadd.f32 %v265, %v471
      %v473 = vpop.f32.mrf.mxu0
      %474 = vmatprep.mubr.bf16.mxu0 0
      %475 = vmatmul.mubr.bf16.gmra.mxu0 %v370
      %v476 = vpop.f32.mrf.mxu0
      %v477 = vadd.f32 %v265, %v476
      %v478 = vpop.f32.mrf.mxu0
      %v479 = vpop.f32.mrf.mxu0
      %v480 = vadd.f32 %v265, %v479
      %v481 = vpop.f32.mrf.mxu0
      %482 = vmatprep.mubr.bf16.mxu0 0
      %483 = vmatmul.mubr.bf16.gmra.mxu0 %v373
      %v484 = vpop.f32.mrf.mxu0
      %v485 = vadd.f32 %v265, %v484
      %v486 = vpop.f32.mrf.mxu0
      %v487 = vpop.f32.mrf.mxu0
      %v488 = vadd.f32 %v265, %v487
      %v489 = vpop.f32.mrf.mxu0
      %490 = vmatprep.mubr.bf16.mxu0 0
      %491 = vmatmul.mubr.bf16.gmra.mxu0 %v376
      %v492 = vpop.f32.mrf.mxu0
      %v493 = vadd.f32 %v265, %v492
      %v494 = vpop.f32.mrf.mxu0
      %v495 = vpop.f32.mrf.mxu0
      %v496 = vadd.f32 %v265, %v495
      %v497 = vpop.f32.mrf.mxu0
      %498 = vmatprep.mubr.bf16.mxu0 0
      %499 = vmatmul.mubr.bf16.gmra.mxu0 %v379
      %v500 = vpop.f32.mrf.mxu0
      %v501 = vadd.f32 %v265, %v500
      %v502 = vpop.f32.mrf.mxu0
      %v503 = vpop.f32.mrf.mxu0
      %v504 = vadd.f32 %v265, %v503
      %v505 = vpop.f32.mrf.mxu0
      %506 = vmatprep.mubr.bf16.mxu0 0
      %507 = vmatmul.mubr.bf16.gmra.mxu0 %v382
      %v508 = vpop.f32.mrf.mxu0
      %v509 = vadd.f32 %v265, %v508
      %v510 = vpop.f32.mrf.mxu0
      %v511 = vpop.f32.mrf.mxu0
      %v512 = vadd.f32 %v265, %v511
      %v513 = vpop.f32.mrf.mxu0
      %514 = vmatprep.mubr.bf16.mxu0 0
      %515 = vmatmul.mubr.bf16.gmra.mxu0 %v385
      %v516 = vpop.f32.mrf.mxu0
      %v517 = vadd.f32 %v265, %v516
      %v518 = vpop.f32.mrf.mxu0
      %v519 = vpop.f32.mrf.mxu0
      %v520 = vadd.f32 %v265, %v519
      %v521 = vpop.f32.mrf.mxu0
      %522 = vmatprep.mubr.bf16.mxu0 0
      %523 = vmatmul.mubr.bf16.gmra.mxu0 %v388
      %v524 = vpop.f32.mrf.mxu0
      %v525 = vadd.f32 %v265, %v524
      %v526 = vpop.f32.mrf.mxu0
      %v527 = vpop.f32.mrf.mxu0
      %v528 = vadd.f32 %v265, %v527
      %v529 = vpop.f32.mrf.mxu0
      %530 = vmatprep.mubr.bf16.mxu0 0
      %531 = vmatmul.mubr.bf16.gmra.mxu0 %v391
      %v532 = vpop.f32.mrf.mxu0
      %v533 = vadd.f32 %v265, %v532
      %v534 = vpop.f32.mrf.mxu0
      %v535 = vpop.f32.mrf.mxu0
      %v536 = vadd.f32 %v265, %v535
      %v537 = vpop.f32.mrf.mxu0
      %538 = vmatprep.mubr.bf16.mxu0 0
      %539 = vmatmul.mubr.bf16.gmra.mxu0 %v394
      %v540 = vpop.f32.mrf.mxu0
      %v541 = vadd.f32 %v265, %v540
      %v542 = vpop.f32.mrf.mxu0
      %v543 = vpop.f32.mrf.mxu0
      %v544 = vadd.f32 %v265, %v543
      %v545 = vpop.f32.mrf.mxu0
      %546 = vmatprep.mubr.bf16.mxu0 0
      %547 = vmatmul.mubr.bf16.gmra.mxu0 %v397
      %v548 = vpop.f32.mrf.mxu0
      %v549 = vadd.f32 %v265, %v548
      %v550 = vpop.f32.mrf.mxu0
      %v551 = vpop.f32.mrf.mxu0
      %v552 = vadd.f32 %v265, %v551
      %v553 = vpop.f32.mrf.mxu0
      %554 = vmatprep.mubr.bf16.mxu0 0
      %555 = vmatmul.mubr.bf16.gmra.mxu0 %v400
      %v556 = vpop.f32.mrf.mxu0
      %v557 = vadd.f32 %v265, %v556
      %v558 = vpop.f32.mrf.mxu0
      %v559 = vpop.f32.mrf.mxu0
      %v560 = vadd.f32 %v265, %v559
      %v561 = vpop.f32.mrf.mxu0
      %562 = vdwg.mxu0
      %v563 = vpack.c.bf16 %v440, %v437
      %v564 = vpack.c.bf16 %v448, %v445
      %v565 = vpack.c.bf16 %v456, %v453
      %v566 = vpack.c.bf16 %v464, %v461
      %v567 = vpack.c.bf16 %v472, %v469
      %v568 = vpack.c.bf16 %v480, %v477
      %v569 = vpack.c.bf16 %v488, %v485
      %v570 = vpack.c.bf16 %v496, %v493
      %v571 = vpack.c.bf16 %v504, %v501
      %v572 = vpack.c.bf16 %v512, %v509
      %v573 = vpack.c.bf16 %v520, %v517
      %v574 = vpack.c.bf16 %v528, %v525
      %v575 = vpack.c.bf16 %v536, %v533
      %v576 = vpack.c.bf16 %v544, %v541
      %v577 = vpack.c.bf16 %v552, %v549
      %v578 = vpack.c.bf16 %v560, %v557
      %v595 = vunpack.c.l.b16 %v563
      %v596 = vunpack.c.h.b16 %v563
      %v597 = vunpack.c.l.b16 %v564
      %v598 = vunpack.c.h.b16 %v564
      %v599 = vunpack.c.l.b16 %v565
      %v600 = vunpack.c.h.b16 %v565
      %v601 = vunpack.c.l.b16 %v566
      %v602 = vunpack.c.h.b16 %v566
      %v603 = vunpack.c.l.b16 %v567
      %v604 = vunpack.c.h.b16 %v567
      %v605 = vunpack.c.l.b16 %v568
      %v606 = vunpack.c.h.b16 %v568
      %v607 = vunpack.c.l.b16 %v569
      %v608 = vunpack.c.h.b16 %v569
      %v609 = vunpack.c.l.b16 %v570
      %v610 = vunpack.c.h.b16 %v570
      %v611 = vunpack.c.l.b16 %v571
      %v612 = vunpack.c.h.b16 %v571
      %v613 = vunpack.c.l.b16 %v572
      %v614 = vunpack.c.h.b16 %v572
      %v615 = vunpack.c.l.b16 %v573
      %v616 = vunpack.c.h.b16 %v573
      %v617 = vunpack.c.l.b16 %v574
      %v618 = vunpack.c.h.b16 %v574
      %v619 = vunpack.c.l.b16 %v575
      %v620 = vunpack.c.h.b16 %v575
      %v621 = vunpack.c.l.b16 %v576
      %v622 = vunpack.c.h.b16 %v576
      %v623 = vunpack.c.l.b16 %v577
      %v624 = vunpack.c.h.b16 %v577
      %v625 = vunpack.c.l.b16 %v578
      %v626 = vunpack.c.h.b16 %v578
      %v627 = vpack.c.b16 %v595, %v595
      %v628 = vpack.c.b16 %v596, %v596
      %v629 = vpack.c.b16 %v597, %v597
      %v630 = vpack.c.b16 %v598, %v598
      %v631 = vpack.c.b16 %v599, %v599
      %v632 = vpack.c.b16 %v600, %v600
      %v633 = vpack.c.b16 %v601, %v601
      %v634 = vpack.c.b16 %v602, %v602
      %v635 = vpack.c.b16 %v603, %v603
      %v636 = vpack.c.b16 %v604, %v604
      %v637 = vpack.c.b16 %v605, %v605
      %v638 = vpack.c.b16 %v606, %v606
      %v639 = vpack.c.b16 %v607, %v607
      %v640 = vpack.c.b16 %v608, %v608
      %v641 = vpack.c.b16 %v609, %v609
      %v642 = vpack.c.b16 %v610, %v610
      %v643 = vpack.c.b16 %v611, %v611
      %v644 = vpack.c.b16 %v612, %v612
      %v645 = vpack.c.b16 %v613, %v613
      %v646 = vpack.c.b16 %v614, %v614
      %v647 = vpack.c.b16 %v615, %v615
      %v648 = vpack.c.b16 %v616, %v616
      %v649 = vpack.c.b16 %v617, %v617
      %v650 = vpack.c.b16 %v618, %v618
      %v651 = vpack.c.b16 %v619, %v619
      %v652 = vpack.c.b16 %v620, %v620
      %v653 = vpack.c.b16 %v621, %v621
      %v654 = vpack.c.b16 %v622, %v622
      %v655 = vpack.c.b16 %v623, %v623
      %v656 = vpack.c.b16 %v624, %v624
      %v657 = vpack.c.b16 %v625, %v625
      %v658 = vpack.c.b16 %v626, %v626
      %691 = vst [vmem:[%s223] sm:$0xf] %v627
      %692 = vst [vmem:[%s223 + $0x4] sm:$0xf] %v628
      %693 = vst [vmem:[%s223 + $0x8] sm:$0xf] %v629
      %694 = vst [vmem:[%s223 + $0xc] sm:$0xf] %v630
      %695 = vst [vmem:[%s223 + $0x10] sm:$0xf] %v631
      %696 = vst [vmem:[%s223 + $0x14] sm:$0xf] %v632
      %697 = vst [vmem:[%s223 + $0x18] sm:$0xf] %v633
      %698 = vst [vmem:[%s223 + $0x1c] sm:$0xf] %v634
      %699 = vst [vmem:[%s223 + $0x20] sm:$0xf] %v635
      %700 = vst [vmem:[%s223 + $0x24] sm:$0xf] %v636
      %701 = vst [vmem:[%s223 + $0x28] sm:$0xf] %v637
      %702 = vst [vmem:[%s223 + $0x2c] sm:$0xf] %v638
      %703 = vst [vmem:[%s223 + $0x30] sm:$0xf] %v639
      %704 = vst [vmem:[%s223 + $0x34] sm:$0xf] %v640
      %705 = vst [vmem:[%s223 + $0x38] sm:$0xf] %v641
      %706 = vst [vmem:[%s223 + $0x3c] sm:$0xf] %v642
      %707 = vst [vmem:[%s223 + $0x40] sm:$0xf] %v643
      %708 = vst [vmem:[%s223 + $0x44] sm:$0xf] %v644
      %709 = vst [vmem:[%s223 + $0x48] sm:$0xf] %v645
      %710 = vst [vmem:[%s223 + $0x4c] sm:$0xf] %v646
      %711 = vst [vmem:[%s223 + $0x50] sm:$0xf] %v647
      %712 = vst [vmem:[%s223 + $0x54] sm:$0xf] %v648
      %713 = vst [vmem:[%s223 + $0x58] sm:$0xf] %v649
      %714 = vst [vmem:[%s223 + $0x5c] sm:$0xf] %v650
      %715 = vst [vmem:[%s223 + $0x60] sm:$0xf] %v651
      %716 = vst [vmem:[%s223 + $0x64] sm:$0xf] %v652
      %717 = vst [vmem:[%s223 + $0x68] sm:$0xf] %v653
      %718 = vst [vmem:[%s223 + $0x6c] sm:$0xf] %v654
      %719 = vst [vmem:[%s223 + $0x70] sm:$0xf] %v655
      %720 = vst [vmem:[%s223 + $0x74] sm:$0xf] %v656
      %721 = vst [vmem:[%s223 + $0x78] sm:$0xf] %v657
      %722 = vst [vmem:[%s223 + $0x7c] sm:$0xf] %v658
      %s723 = smul.u32 32, %s18
      %p724 = scmp.lt.s32.totalorder %s723, 63
      %s725 = scalar_select %p724, %s723, 63
      %p726 = scmp.lt.s32.totalorder %s19, 0
      %s727 = scalar_select %p726, %s19, 0
      %s728 = sadd.s32 %s727, %s725
      %s729 = smul.addr %s728, 4
      %s730 = scalar_lea.vmem %s3, %s729
      // Predicated region
      $region33: #{matmul_bias_act.1} parent=31 // pred_check
        %p731 = pneg %p124
      $region34: #{matmul_bias_act.1} parent=31 // pred_check_branch
        %733 = sbr.rel (%p731) target = $region36
      $region35: #{matmul_bias_act.1} parent=31 // pred_region
        %s734 = smul.u32 32, %s18
      $region36: #{matmul_bias_act.1} parent=31 // pred_fallthru
        _
    $region32: #{matmul_bias_act.1} parent=5 // pred_fallthru
      _
    %p735 = scmp.le.s32.totalorder 2, %s9
    // Predicated region
    $region37: #{matmul_bias_act.1} parent=5 // pred_check
      %p736 = pneg %p735
    $region38: #{matmul_bias_act.1} parent=5 // pred_check_branch
      %738 = sbr.rel (%p736) target = $region40
    $region39: #{matmul_bias_act.1} parent=5 // pred_region
      %s739 = ssub.s32 %s9, 2
      // Predicated region
      $region41: #{matmul_bias_act.1} parent=39 // pred_check
        %p740 = pneg %p130
      $region42: #{matmul_bias_act.1} parent=39 // pred_check_branch
        %742 = sbr.rel (%p740) target = $region44
      $region43: #{matmul_bias_act.1} parent=39 // pred_region
        %s743 = smul.u32 32, %s20
        %p744 = scmp.lt.s32.totalorder %s743, 63
        %s745 = scalar_select %p744, %s743, 63
        %p746 = scmp.lt.s32.totalorder %s21, 0
        %s747 = scalar_select %p746, %s21, 0
        %s748 = sadd.s32 %s747, %s745
        %s749 = smul.addr %s748, 4
        %s750 = scalar_lea.vmem %s3, %s749
      $region44: #{matmul_bias_act.1} parent=39 // pred_fallthru
        _
    $region40: #{matmul_bias_act.1} parent=5 // pred_fallthru
      _
  $region6: #{matmul_bias_act.1} parent=0 // loop_footer
    %s13 = sadd.s32 1, %s9
  $region7: #{matmul_bias_act.1} parent=0 // loop_footer_branch
    %8 = sbr.rel target = $region3
  $region8: #{matmul_bias_act.1} parent=0 // loop_exit
    _

</llo_original>
